<compile_context>
chip_gen: v7x
topology: tpu7x:2x2x1
jax: 0.10.0
libtpu: 0.0.40
codegen_flags: <defaults>
</compile_context>

<pallas_src>
import functools
import math

import jax
import jax.numpy as jnp
from jax.experimental import pallas as pl
from jax.experimental.pallas import tpu as pltpu


# ----------------------------- Pallas kernel -------------------------------

def _tiled_linear_kernel(x_ref, w_ref, b_ref, o_ref, *, use_tanh):
    """One output-column tile: o_tile = act(x @ W_tile + b_tile).

    x (Bp, K) bf16 is resident (constant block index across the grid); only the
    weight column tile streams from HBM each step, so DMA of W pipelines with
    the MXU matmul.  Accumulation is float32.
    """
    acc = jnp.dot(x_ref[...], w_ref[...], preferred_element_type=jnp.float32)
    acc = acc + b_ref[...]
    if use_tanh:
        acc = jnp.tanh(acc)
    o_ref[...] = acc.astype(o_ref.dtype)


def _pick_tile(n, max_tile):
    """Largest multiple of 128 that divides n and is <= max_tile (else n)."""
    if n % 128 != 0:
        return n
    t = min(max_tile, n)
    t -= t % 128
    while n % t != 0:
        t -= 128
    return t


def tiled_linear(x, w, b, *, use_tanh, out_dtype, max_tile_n=512,
                 vmem_limit_bytes=64 * 1024 * 1024):
    """y = act(x @ W + b), tiled over the output (lane) dimension."""
    Bp, K = x.shape
    Kw, N = w.shape
    assert K == Kw and b.shape == (1, N)
    tn = _pick_tile(N, max_tile_n)          # lane-dense, VMEM-safe column tile
    grid = (N // tn,)
    kernel = functools.partial(_tiled_linear_kernel, use_tanh=use_tanh)
    return pl.pallas_call(
        kernel,
        out_shape=jax.ShapeDtypeStruct((Bp, N), out_dtype),
        grid_spec=pltpu.PrefetchScalarGridSpec(
            num_scalar_prefetch=0,
            grid=grid,
            in_specs=[
                pl.BlockSpec((Bp, K), lambda j: (0, 0)),   # resident activations
                pl.BlockSpec((K, tn), lambda j: (0, j)),   # streamed weight tile
                pl.BlockSpec((1, tn), lambda j: (0, j)),   # bias tile (follows j)
            ],
            out_specs=pl.BlockSpec((Bp, tn), lambda j: (0, j)),
        ),
        compiler_params=pltpu.CompilerParams(
            # Independent column tiles -> shard across v7x's two TensorCores.
            dimension_semantics=("parallel",),
            vmem_limit_bytes=vmem_limit_bytes),
    )(x, w, b)


def clip_project(features, w1, b1, w2, b2):
    """MLP mapper: y = Linear2(tanh(Linear1(x))).  1/divider is folded into W1."""
    B = features.shape[0]
    Bp = ((B + 7) // 8) * 8                 # pad batch to a sublane multiple
    x = jnp.zeros((Bp, features.shape[1]), jnp.bfloat16)
    x = x.at[:B].set(features.astype(jnp.bfloat16))
    # Layer 1 computed once (small); output kept bf16 so layer 2 streams bf16.
    h = tiled_linear(x, w1, b1, use_tanh=True, out_dtype=jnp.bfloat16)
    # Layer 2: pure W2 stream over output-column tiles, f32 result.
    y = tiled_linear(h, w2, b2, use_tanh=False, out_dtype=jnp.float32)
    return y[:B]


# ----------------------------- parameter setup ------------------------------

def init_clipcap_params(key, *, vocab_size, n_embd, prefix_size, prefix_length):
    """Deterministic synthetic parameters (PyTorch-Linear-style uniform init)."""
    hidden = n_embd * prefix_length // 2          # MLP hidden size (num_layers=1)
    out_dim = n_embd * prefix_length              # MLP output size
    divider = math.sqrt(out_dim / prefix_size)    # MLP.divider
    k_wte, k_w1, k_b1, k_w2, k_b2 = jax.random.split(key, 5)

    def linear(kw, kb, fan_in, fan_out):
        bound = 1.0 / math.sqrt(fan_in)
        # Stored already transposed to (in, out) for x @ W convenience.
        w = jax.random.uniform(kw, (fan_in, fan_out), jnp.float32, -bound, bound)
        b = jax.random.uniform(kb, (1, fan_out), jnp.float32, -bound, bound)
        return w, b

    w1_f32, b1 = linear(k_w1, k_b1, prefix_size, hidden)
    w2_f32, b2 = linear(k_w2, k_b2, hidden, out_dim)
    # Fold the input scale into W1 ((x/d) @ W1 == x @ (W1/d)); store weights in
    # bf16 so the kernel streams half the HBM bytes.  Biases stay f32 (tiny).
    w1 = (w1_f32 / divider).astype(jnp.bfloat16)
    w2 = w2_f32.astype(jnp.bfloat16)
    wte = jax.random.normal(k_wte, (vocab_size, n_embd), jnp.float32) * 0.02
    return dict(wte=wte, w1=w1, b1=b1, w2=w2, b2=b2,
                n_embd=n_embd, prefix_length=prefix_length)


# ----------------------------- forward wrapper ------------------------------

def clipcap_forward_embedding(params, input_ids, features, attention_mask):
    """Mirrors ClipCap.forward_embedding up to the call into the GPT LM."""
    prefix_length = params["prefix_length"]
    n_embd = params["n_embd"]

    # embedding = self.gpt.transformer.wte(input_ids)      (gather; JAX glue)
    embedding = jnp.take(params["wte"], input_ids, axis=0)         # (B, S, D)

    # prefix_projections = self.clip_project(features).reshape(-1, P, D)
    proj = clip_project(features, params["w1"], params["b1"],
                        params["w2"], params["b2"])                # (B, P*D)
    prefix_projections = proj.reshape(-1, prefix_length, n_embd)

    # embedding = cat((prefix, embedding), dim=1)
    # (single XLA concat; avoids an extra materialized intermediate buffer)
    inputs_embeds = jnp.concatenate(
        [prefix_projections.astype(embedding.dtype), embedding], axis=1)

    # attention_mask = cat([ones prefix mask, attention_mask], dim=1)
    prefix_mask = jnp.repeat(jnp.ones_like(attention_mask[:, :1]),
                             prefix_length, axis=1)
    attention_mask = jnp.concatenate([prefix_mask, attention_mask], axis=1)

    # TODO(synk): outputs = self.gpt(inputs_embeds=..., attention_mask=...) is a
    # pretrained HuggingFace causal LM — no clean Pallas equivalent; returning
    # the tensors that would be fed to it (and that define the prefix slicing).
    return inputs_embeds, attention_mask


# --------------------------------- main -------------------------------------

if __name__ == "__main__":
    # Small shapes consistent with ClipCap's forward (kept 128-aligned so the
    # column-tiling path is exercised: hidden=512 -> 1 tile, out_dim=1024 -> 2).
    B, S = 2, 8
    prefix_size = 128       # CLIP feature dim
    n_embd = 128            # GPT embedding dim
    prefix_length = 8
    vocab_size = 256

    key = jax.random.PRNGKey(0)
    k_params, k_ids, k_feat = jax.random.split(key, 3)
    params = init_clipcap_params(k_params, vocab_size=vocab_size, n_embd=n_embd,
                                 prefix_size=prefix_size,
                                 prefix_length=prefix_length)

    input_ids = jax.random.randint(k_ids, (B, S), 0, vocab_size, jnp.int32)
    features = jax.random.normal(k_feat, (B, prefix_size), jnp.float32)
    attention_mask = jnp.ones((B, S), jnp.float32)

    inputs_embeds, new_mask = clipcap_forward_embedding(
        params, input_ids, features, attention_mask)
    jax.block_until_ready((inputs_embeds, new_mask))

    # Reference check of the Pallas MLP against plain JAX, mirroring the bf16
    # weight / bf16-hidden path used by the kernel (f32 accumulation).
    x32 = features.astype(jnp.bfloat16).astype(jnp.float32)
    w1_32 = params["w1"].astype(jnp.float32)
    w2_32 = params["w2"].astype(jnp.float32)
    h_ref = jnp.tanh(x32 @ w1_32 + params["b1"])
    h_ref = h_ref.astype(jnp.bfloat16).astype(jnp.float32)
    ref = h_ref @ w2_32 + params["b2"]
    ref_prefix = ref.reshape(-1, prefix_length, n_embd)

    assert inputs_embeds.shape == (B, prefix_length + S, n_embd)
    assert new_mask.shape == (B, prefix_length + S)
    assert jnp.allclose(inputs_embeds[:, :prefix_length], ref_prefix,
                        atol=5e-3, rtol=5e-3)
    assert jnp.allclose(inputs_embeds[:, prefix_length:],
                        jnp.take(params["wte"], input_ids, axis=0))
    assert jnp.all(new_mask[:, :prefix_length] == 1)

    print("KERNEL_OK")
</pallas_src>

<mosaic_0001>
module attributes {stable_mosaic.version = 11 : i64} {
  func.func @_tiled_linear_kernel(%arg0: i32, %arg1: memref<8x128xbf16, #tpu.memory_space<vmem>>, %arg2: memref<128x512xbf16, #tpu.memory_space<vmem>>, %arg3: memref<1x512xf32, #tpu.memory_space<vmem>>, %arg4: memref<8x512xbf16, #tpu.memory_space<vmem>>) attributes {dimension_semantics = [#tpu.dimension_semantics<parallel>], iteration_bounds = array<i64: 1>, scalar_prefetch = 0 : i64, scratch_operands = 0 : i64, tpu.core_type = #tpu.core_type<tc>, window_params = [{pipeline_mode = #tpu.pipeline_mode<synchronous>, transform_indices = @transform_0, window_bounds = array<i64: 8, 128>}, {transform_indices = @transform_1, window_bounds = array<i64: 128, 512>}, {transform_indices = @transform_2, window_bounds = array<i64: 1, 512>}, {transform_indices = @transform_3, window_bounds = array<i64: 8, 512>}]} {
    %c0 = arith.constant 0 : index
    %c0_0 = arith.constant 0 : index
    %0 = vector.load %arg1[%c0, %c0_0] : memref<8x128xbf16, #tpu.memory_space<vmem>>, vector<8x128xbf16>
    %c0_1 = arith.constant 0 : index
    %c0_2 = arith.constant 0 : index
    %1 = vector.load %arg2[%c0_1, %c0_2] : memref<128x512xbf16, #tpu.memory_space<vmem>>, vector<128x512xbf16>
    %cst = arith.constant dense<0.000000e+00> : vector<8x512xf32>
    %2 = tpu.matmul %0, %1, %cst {dimension_numbers = #tpu.dot_dimension_numbers<[1], [0], [0], [1], [0, 0, 1, 1], [], []>} : vector<8x128xbf16>, vector<128x512xbf16>, vector<8x512xf32> -> vector<8x512xf32>
    %c0_3 = arith.constant 0 : index
    %c0_4 = arith.constant 0 : index
    %3 = vector.load %arg3[%c0_3, %c0_4] : memref<1x512xf32, #tpu.memory_space<vmem>>, vector<1x512xf32>
    %4 = vector.broadcast %3 : vector<1x512xf32> to vector<8x512xf32>
    %5 = arith.addf %2, %4 : vector<8x512xf32>
    %6 = math.tanh %5 : vector<8x512xf32>
    %7 = arith.truncf %6 : vector<8x512xf32> to vector<8x512xbf16>
    %c0_5 = arith.constant 0 : index
    %c0_6 = arith.constant 0 : index
    %8 = vector.load %arg4[%c0_5, %c0_6] : memref<8x512xbf16, #tpu.memory_space<vmem>>, vector<8x512xbf16>
    tpu.vector_store %arg4[%c0_5, %c0_6], %7 {strides = array<i32>} : memref<8x512xbf16, #tpu.memory_space<vmem>>, vector<8x512xbf16>,
    return
  }
  func.func @transform_0(%arg0: i32) -> (i32, i32) {
    %c0_i32 = arith.constant 0 : i32
    %c0_i32_0 = arith.constant 0 : i32
    %c0_i32_1 = arith.constant 0 : i32
    return %c0_i32, %c0_i32_0 : i32, i32
  }
  func.func @transform_1(%arg0: i32) -> (i32, i32) {
    %c0_i32 = arith.constant 0 : i32
    %c0_i32_0 = arith.constant 0 : i32
    return %c0_i32, %arg0 : i32, i32
  }
  func.func @transform_2(%arg0: i32) -> (i32, i32) {
    %c0_i32 = arith.constant 0 : i32
    %c0_i32_0 = arith.constant 0 : i32
    return %c0_i32, %arg0 : i32, i32
  }
  func.func @transform_3(%arg0: i32) -> (i32, i32) {
    %c0_i32 = arith.constant 0 : i32
    %c0_i32_0 = arith.constant 0 : i32
    return %c0_i32, %arg0 : i32, i32
  }
}

</mosaic_0001>

<llo_original>
// kernel: tpu_custom_call.1
$region0: #{tpu_custom_call.1}
  #allocation0 [shape = 'u32[]', space=smem, size = 0x4, offset = 0x4, fixed_abs, tag = 'smem constant byte address 0x4 - core index']
  #allocation1 [shape = 'u32[144,128]{1,0:T(1,128)}', space=vmem, size = 0x12000, scoped, tag = 'internal scratch']
  %s0 = inlined_call_operand.hbm [shape: bf16[8,128], index: 0, kind: input, shape index: {}]
  %s1 = inlined_call_operand.hbm [shape: bf16[128,512], index: 1, kind: input, shape index: {}]
  %s2 = inlined_call_operand.hbm [shape: f32[1,512], index: 2, kind: input, shape index: {}]
  %s3 = inlined_call_operand.hbm [shape: bf16[8,512], index: 3, kind: output, shape index: {}]
  %s4 = sld [smem:[#allocation0]]
  $region34: #{tpu_custom_call.1} parent=0
    _
  %s6 = ssub.s32 1, %s4
  %s7 = scalar_select 0, %s6, %s4
  $region1: #{tpu_custom_call.1} parent=0
    #allocation2 [shape = 'u8[2048]{0}', space=vmem, size = 0x800, scoped, tag = 'input window, operand 0, single buffered']
    #allocation3 [shape = 's32[1]{0}', space=sflag, size = 0x4, scoped, tag = 'scoped memory for tpu_custom_call.1']
    #allocation4 [shape = 's32[1]{0}', space=sflag, size = 0x4, scoped, tag = 'scoped memory for tpu_custom_call.1']
    #allocation5 [shape = 'u8[131072]{0}', space=vmem, size = 0x20000, scoped, tag = 'input window, operand 1, single buffered']
    #allocation6 [shape = 's32[1]{0}', space=sflag, size = 0x4, scoped, tag = 'scoped memory for tpu_custom_call.1']
    #allocation7 [shape = 'u8[2048]{0}', space=vmem, size = 0x800, scoped, tag = 'input window, operand 2, single buffered']
    #allocation8 [shape = 'u8[8192]{0}', space=vmem, size = 0x2000, scoped, tag = 'output window, operand 0, single buffered']
    %8 = vsyncpa [#allocation3], 0
    %9 = vsyncpa [#allocation6], 0
    %10 = vsyncpa [#allocation4], 0
    // Predicated region
    $region2: #{tpu_custom_call.1} parent=1 // pred_check
      _
    $region3: #{tpu_custom_call.1} parent=1 // pred_check_branch
      %12 = sbr.rel (0) target = $region5
    $region4: #{tpu_custom_call.1} parent=1 // pred_region
      %s14 = ssub.s32 64, 64
      %15 = vsyncadd [#allocation3], %s14
      %s17 = sshll.u32 [#allocation2], 4
      %s18 = int_to_ptr.vmem [resolvable:$true] %s17
      %20 = dma.hbm_to_vmem [thread:$0]  %s0, 64, %s18, [#allocation3]
    $region5: #{tpu_custom_call.1} parent=1 // pred_fallthru
      _
    // Predicated region
    $region6: #{tpu_custom_call.1} parent=1 // pred_check
      _
    $region7: #{tpu_custom_call.1} parent=1 // pred_check_branch
      %22 = sbr.rel (0) target = $region9
    $region8: #{tpu_custom_call.1} parent=1 // pred_region
      %s24 = ssub.s32 4096, 4096
      %25 = vsyncadd [#allocation6], %s24
      %s26 = sshll.u32 [#allocation5], 4
      %s27 = int_to_ptr.vmem [resolvable:$true] %s26
      %32 = dma.hbm_to_vmem [thread:$0]  %s1, 4096, %s27, [#allocation6], 256, 256, 16
    $region9: #{tpu_custom_call.1} parent=1 // pred_fallthru
      _
    // Predicated region
    $region10: #{tpu_custom_call.1} parent=1 // pred_check
      _
    $region11: #{tpu_custom_call.1} parent=1 // pred_check_branch
      %34 = sbr.rel (0) target = $region13
    $region12: #{tpu_custom_call.1} parent=1 // pred_region
      %s36 = ssub.s32 64, 64
      %37 = vsyncadd [#allocation6], %s36
      %s39 = sshll.u32 [#allocation7], 4
      %s40 = int_to_ptr.vmem [resolvable:$true] %s39
      %42 = dma.hbm_to_vmem [thread:$0]  %s2, 64, %s40, [#allocation6]
    $region13: #{tpu_custom_call.1} parent=1 // pred_fallthru
      _
    // Predicated region
    $region14: #{tpu_custom_call.1} parent=1 // pred_check
      _
    $region15: #{tpu_custom_call.1} parent=1 // pred_check_branch
      %44 = sbr.rel (0) target = $region17
    $region16: #{tpu_custom_call.1} parent=1 // pred_region
      %45 = dma.done [#allocation3], 64
    $region17: #{tpu_custom_call.1} parent=1 // pred_fallthru
      _
    // Predicated region
    $region18: #{tpu_custom_call.1} parent=1 // pred_check
      _
    $region19: #{tpu_custom_call.1} parent=1 // pred_check_branch
      %47 = sbr.rel (0) target = $region21
    $region20: #{tpu_custom_call.1} parent=1 // pred_region
      %48 = dma.done [#allocation6], 4096
    $region21: #{tpu_custom_call.1} parent=1 // pred_fallthru
      _
    // Predicated region
    $region22: #{tpu_custom_call.1} parent=1 // pred_check
      _
    $region23: #{tpu_custom_call.1} parent=1 // pred_check_branch
      %50 = sbr.rel (0) target = $region25
    $region24: #{tpu_custom_call.1} parent=1 // pred_region
      %51 = dma.done [#allocation6], 64
    $region25: #{tpu_custom_call.1} parent=1 // pred_fallthru
      _
    %v53 = vld [vmem:[#allocation2] sm:$0xf]
    %v54 = vld [vmem:[#allocation5] sm:$0xff]
    %v55 = vld [vmem:[#allocation5 + $0x8] sm:$0xff]
    %v56 = vld [vmem:[#allocation5 + $0x10] sm:$0xff]
    %v57 = vld [vmem:[#allocation5 + $0x18] sm:$0xff]
    %v58 = vld [vmem:[#allocation5 + $0x20] sm:$0xff]
    %v59 = vld [vmem:[#allocation5 + $0x28] sm:$0xff]
    %v60 = vld [vmem:[#allocation5 + $0x30] sm:$0xff]
    %v61 = vld [vmem:[#allocation5 + $0x38] sm:$0xff]
    %v62 = vld [vmem:[#allocation5 + $0x40] sm:$0xff]
    %v63 = vld [vmem:[#allocation5 + $0x48] sm:$0xff]
    %v64 = vld [vmem:[#allocation5 + $0x50] sm:$0xff]
    %v65 = vld [vmem:[#allocation5 + $0x58] sm:$0xff]
    %v66 = vld [vmem:[#allocation5 + $0x60] sm:$0xff]
    %v67 = vld [vmem:[#allocation5 + $0x68] sm:$0xff]
    %v68 = vld [vmem:[#allocation5 + $0x70] sm:$0xff]
    %v69 = vld [vmem:[#allocation5 + $0x78] sm:$0xff]
    %v70 = vld [vmem:[#allocation5 + $0x80] sm:$0xff]
    %v71 = vld [vmem:[#allocation5 + $0x88] sm:$0xff]
    %v72 = vld [vmem:[#allocation5 + $0x90] sm:$0xff]
    %v73 = vld [vmem:[#allocation5 + $0x98] sm:$0xff]
    %v74 = vld [vmem:[#allocation5 + $0xa0] sm:$0xff]
    %v75 = vld [vmem:[#allocation5 + $0xa8] sm:$0xff]
    %v76 = vld [vmem:[#allocation5 + $0xb0] sm:$0xff]
    %v77 = vld [vmem:[#allocation5 + $0xb8] sm:$0xff]
    %v78 = vld [vmem:[#allocation5 + $0xc0] sm:$0xff]
    %v79 = vld [vmem:[#allocation5 + $0xc8] sm:$0xff]
    %v80 = vld [vmem:[#allocation5 + $0xd0] sm:$0xff]
    %v81 = vld [vmem:[#allocation5 + $0xd8] sm:$0xff]
    %v82 = vld [vmem:[#allocation5 + $0xe0] sm:$0xff]
    %v83 = vld [vmem:[#allocation5 + $0xe8] sm:$0xff]
    %v84 = vld [vmem:[#allocation5 + $0xf0] sm:$0xff]
    %v85 = vld [vmem:[#allocation5 + $0xf8] sm:$0xff]
    %v86 = vld [vmem:[#allocation7] sm:$0xf]
    %v88 = vlaneseq
    %v89 = vshrl.u32 %v88, 7
    %v90 = vsub.s32 0, %v89
    %v91 = vrot.slane %v86, %v90
    %v92 = vlaneseq
    %v93 = vshrl.u32 %v92, 7
    %v94 = vsub.s32 1, %v93
    %v95 = vrot.slane %v86, %v94
    %v96 = vlaneseq
    %v97 = vshrl.u32 %v96, 7
    %v98 = vsub.s32 2, %v97
    %v99 = vrot.slane %v86, %v98
    %v100 = vlaneseq
    %v101 = vshrl.u32 %v100, 7
    %v102 = vsub.s32 3, %v101
    %v103 = vrot.slane %v86, %v102
    %v140 = vunpack.c.l.b16 %v54
    %v141 = vunpack.c.h.b16 %v54
    %v142 = vunpack.c.l.b16 %v55
    %v143 = vunpack.c.h.b16 %v55
    %v144 = vunpack.c.l.b16 %v56
    %v145 = vunpack.c.h.b16 %v56
    %v146 = vunpack.c.l.b16 %v57
    %v147 = vunpack.c.h.b16 %v57
    %v148 = vunpack.c.l.b16 %v58
    %v149 = vunpack.c.h.b16 %v58
    %v150 = vunpack.c.l.b16 %v59
    %v151 = vunpack.c.h.b16 %v59
    %v152 = vunpack.c.l.b16 %v60
    %v153 = vunpack.c.h.b16 %v60
    %v154 = vunpack.c.l.b16 %v61
    %v155 = vunpack.c.h.b16 %v61
    %v156 = vunpack.c.l.b16 %v62
    %v157 = vunpack.c.h.b16 %v62
    %v158 = vunpack.c.l.b16 %v63
    %v159 = vunpack.c.h.b16 %v63
    %v160 = vunpack.c.l.b16 %v64
    %v161 = vunpack.c.h.b16 %v64
    %v162 = vunpack.c.l.b16 %v65
    %v163 = vunpack.c.h.b16 %v65
    %v164 = vunpack.c.l.b16 %v66
    %v165 = vunpack.c.h.b16 %v66
    %v166 = vunpack.c.l.b16 %v67
    %v167 = vunpack.c.h.b16 %v67
    %v168 = vunpack.c.l.b16 %v68
    %v169 = vunpack.c.h.b16 %v68
    %v170 = vunpack.c.l.b16 %v69
    %v171 = vunpack.c.h.b16 %v69
    %v172 = vunpack.c.l.b16 %v70
    %v173 = vunpack.c.h.b16 %v70
    %v174 = vunpack.c.l.b16 %v71
    %v175 = vunpack.c.h.b16 %v71
    %v176 = vunpack.c.l.b16 %v72
    %v177 = vunpack.c.h.b16 %v72
    %v178 = vunpack.c.l.b16 %v73
    %v179 = vunpack.c.h.b16 %v73
    %v180 = vunpack.c.l.b16 %v74
    %v181 = vunpack.c.h.b16 %v74
    %v182 = vunpack.c.l.b16 %v75
    %v183 = vunpack.c.h.b16 %v75
    %v184 = vunpack.c.l.b16 %v76
    %v185 = vunpack.c.h.b16 %v76
    %v186 = vunpack.c.l.b16 %v77
    %v187 = vunpack.c.h.b16 %v77
    %v188 = vunpack.c.l.b16 %v78
    %v189 = vunpack.c.h.b16 %v78
    %v190 = vunpack.c.l.b16 %v79
    %v191 = vunpack.c.h.b16 %v79
    %v192 = vunpack.c.l.b16 %v80
    %v193 = vunpack.c.h.b16 %v80
    %v194 = vunpack.c.l.b16 %v81
    %v195 = vunpack.c.h.b16 %v81
    %v196 = vunpack.c.l.b16 %v82
    %v197 = vunpack.c.h.b16 %v82
    %v198 = vunpack.c.l.b16 %v83
    %v199 = vunpack.c.h.b16 %v83
    %v200 = vunpack.c.l.b16 %v84
    %v201 = vunpack.c.h.b16 %v84
    %v202 = vunpack.c.l.b16 %v85
    %v203 = vunpack.c.h.b16 %v85
    %v204 = vpack.c.b16 %v144, %v140
    %v205 = vpack.c.b16 %v145, %v141
    %v206 = vpack.c.b16 %v146, %v142
    %v207 = vpack.c.b16 %v147, %v143
    %v208 = vpack.c.b16 %v152, %v148
    %v209 = vpack.c.b16 %v153, %v149
    %v210 = vpack.c.b16 %v154, %v150
    %v211 = vpack.c.b16 %v155, %v151
    %v212 = vpack.c.b16 %v160, %v156
    %v213 = vpack.c.b16 %v161, %v157
    %v214 = vpack.c.b16 %v162, %v158
    %v215 = vpack.c.b16 %v163, %v159
    %v216 = vpack.c.b16 %v168, %v164
    %v217 = vpack.c.b16 %v169, %v165
    %v218 = vpack.c.b16 %v170, %v166
    %v219 = vpack.c.b16 %v171, %v167
    %v220 = vpack.c.b16 %v176, %v172
    %v221 = vpack.c.b16 %v177, %v173
    %v222 = vpack.c.b16 %v178, %v174
    %v223 = vpack.c.b16 %v179, %v175
    %v224 = vpack.c.b16 %v184, %v180
    %v225 = vpack.c.b16 %v185, %v181
    %v226 = vpack.c.b16 %v186, %v182
    %v227 = vpack.c.b16 %v187, %v183
    %v228 = vpack.c.b16 %v192, %v188
    %v229 = vpack.c.b16 %v193, %v189
    %v230 = vpack.c.b16 %v194, %v190
    %v231 = vpack.c.b16 %v195, %v191
    %v232 = vpack.c.b16 %v200, %v196
    %v233 = vpack.c.b16 %v201, %v197
    %v234 = vpack.c.b16 %v202, %v198
    %v235 = vpack.c.b16 %v203, %v199
    %268 = vmatprep.subr.bf16.mxu0 %v205
    %269 = vmatpush1.bf16.msra.mxu0 %v204
    %270 = vmatprep.subr.bf16.mxu0 %v209
    %271 = vmatpush1.bf16.msra.mxu0 %v208
    %272 = vmatprep.subr.bf16.mxu0 %v213
    %273 = vmatpush1.bf16.msra.mxu0 %v212
    %274 = vmatprep.subr.bf16.mxu0 %v217
    %275 = vmatpush1.bf16.msra.mxu0 %v216
    %276 = vmatprep.subr.bf16.mxu0 %v221
    %277 = vmatpush1.bf16.msra.mxu0 %v220
    %278 = vmatprep.subr.bf16.mxu0 %v225
    %279 = vmatpush1.bf16.msra.mxu0 %v224
    %280 = vmatprep.subr.bf16.mxu0 %v229
    %281 = vmatpush1.bf16.msra.mxu0 %v228
    %282 = vmatprep.subr.bf16.mxu0 %v233
    %283 = vmatpush1.bf16.msra.mxu0 %v232
    %284 = vmatprep.subr.bf16.mxu0 0
    %285 = vmatpush1.bf16.msra.mxu0 0
    %286 = vmatprep.subr.bf16.mxu0 0
    %287 = vmatpush1.bf16.msra.mxu0 0
    %288 = vmatprep.subr.bf16.mxu0 0
    %289 = vmatpush1.bf16.msra.mxu0 0
    %290 = vmatprep.subr.bf16.mxu0 0
    %291 = vmatpush1.bf16.msra.mxu0 0
    %292 = vmatprep.subr.bf16.mxu0 0
    %293 = vmatpush1.bf16.msra.mxu0 0
    %294 = vmatprep.subr.bf16.mxu0 0
    %295 = vmatpush1.bf16.msra.mxu0 0
    %296 = vmatprep.subr.bf16.mxu0 0
    %297 = vmatpush1.bf16.msra.mxu0 0
    %298 = vmatprep.subr.bf16.mxu0 0
    %299 = vmatpush1.bf16.msra.mxu0 0
    %300 = vmatprep.mubr.bf16.mxu0 0
    %301 = vmatmul.mubr.bf16.gmra.mrb[0].mxu0 %v53
    %v302 = vpop.f32.mrb[0].mxu0
    %v303 = vadd.f32 %v91, %v302
    %v304 = vpop.f32.mrb[0].mxu0
    %v305 = vadd.f32 %v95, %v304
    %v306 = vpop.f32.mrb[0].mxu0
    %v307 = vpop.f32.mrb[0].mxu0
    %308 = vdwg.mxu0
    %309 = vmatprep.subr.bf16.mxu0 %v207
    %310 = vmatpush1.bf16.msra.mxu0 %v206
    %311 = vmatprep.subr.bf16.mxu0 %v211
    %312 = vmatpush1.bf16.msra.mxu0 %v210
    %313 = vmatprep.subr.bf16.mxu0 %v215
    %314 = vmatpush1.bf16.msra.mxu0 %v214
    %315 = vmatprep.subr.bf16.mxu0 %v219
    %316 = vmatpush1.bf16.msra.mxu0 %v218
    %317 = vmatprep.subr.bf16.mxu0 %v223
    %318 = vmatpush1.bf16.msra.mxu0 %v222
    %319 = vmatprep.subr.bf16.mxu0 %v227
    %320 = vmatpush1.bf16.msra.mxu0 %v226
    %321 = vmatprep.subr.bf16.mxu0 %v231
    %322 = vmatpush1.bf16.msra.mxu0 %v230
    %323 = vmatprep.subr.bf16.mxu0 %v235
    %324 = vmatpush1.bf16.msra.mxu0 %v234
    %325 = vmatprep.subr.bf16.mxu0 0
    %326 = vmatpush1.bf16.msra.mxu0 0
    %327 = vmatprep.subr.bf16.mxu0 0
    %328 = vmatpush1.bf16.msra.mxu0 0
    %329 = vmatprep.subr.bf16.mxu0 0
    %330 = vmatpush1.bf16.msra.mxu0 0
    %331 = vmatprep.subr.bf16.mxu0 0
    %332 = vmatpush1.bf16.msra.mxu0 0
    %333 = vmatprep.subr.bf16.mxu0 0
    %334 = vmatpush1.bf16.msra.mxu0 0
    %335 = vmatprep.subr.bf16.mxu0 0
    %336 = vmatpush1.bf16.msra.mxu0 0
    %337 = vmatprep.subr.bf16.mxu0 0
    %338 = vmatpush1.bf16.msra.mxu0 0
    %339 = vmatprep.subr.bf16.mxu0 0
    %340 = vmatpush1.bf16.msra.mxu0 0
    %341 = vmatprep.mubr.bf16.mxu0 0
    %342 = vmatmul.mubr.bf16.gmra.mrb[0].mxu0 %v53
    %v343 = vpop.f32.mrb[0].mxu0
    %v344 = vadd.f32 %v99, %v343
    %v345 = vpop.f32.mrb[0].mxu0
    %v346 = vadd.f32 %v103, %v345
    %v347 = vpop.f32.mrb[0].mxu0
    %v348 = vpop.f32.mrb[0].mxu0
    %349 = vdwg.mxu0
    %v350 = vtanh.pop %v303
    %v351 = vtanh.pop %v305
    %v352 = vtanh.pop %v344
    %v353 = vtanh.pop %v346
    %v354 = vpack.c.bf16 %v350, %v350
    %v355 = vpack.c.bf16 %v351, %v351
    %v356 = vpack.c.bf16 %v352, %v352
    %v357 = vpack.c.bf16 %v353, %v353
    %v362 = vunpack.c.l.b16 %v354
    %v363 = vunpack.c.l.b16 %v355
    %v364 = vunpack.c.l.b16 %v356
    %v365 = vunpack.c.l.b16 %v357
    %v366 = vpack.c.b16 %v363, %v362
    %v367 = vpack.c.b16 %v365, %v364
    %370 = vst [vmem:[#allocation8] sm:$0xff] %v366
    %371 = vst [vmem:[#allocation8 + $0x8] sm:$0xff] %v367
    // Predicated region
    $region26: #{tpu_custom_call.1} parent=1 // pred_check
      _
    $region27: #{tpu_custom_call.1} parent=1 // pred_check_branch
      %373 = sbr.rel (0) target = $region29
    $region28: #{tpu_custom_call.1} parent=1 // pred_region
      %s375 = ssub.s32 256, 256
      %376 = vsyncadd [#allocation4], %s375
      %s378 = sshll.u32 [#allocation8], 4
      %s379 = int_to_ptr.vmem [resolvable:$true] %s378
      %381 = dma.vmem_to_hbm [thread:$0]  %s379, 256, %s3, [#allocation4]
    $region29: #{tpu_custom_call.1} parent=1 // pred_fallthru
      _
    // Predicated region
    $region30: #{tpu_custom_call.1} parent=1 // pred_check
      _
    $region31: #{tpu_custom_call.1} parent=1 // pred_check_branch
      %383 = sbr.rel (0) target = $region33
    $region32: #{tpu_custom_call.1} parent=1 // pred_region
      %384 = dma.done [#allocation4], 256
    $region33: #{tpu_custom_call.1} parent=1 // pred_fallthru
      _
    %385 = vsyncpa [#allocation3], 1
    %386 = vsyncpa [#allocation6], 1
    %387 = vsyncpa [#allocation4], 1

</llo_original>
